<compile_context>
chip_gen: v6e
topology: v6e:2x2x1
jax: 0.10.0
libtpu: 0.0.40
codegen_flags: <defaults>
</compile_context>

<pallas_src>
import functools

import jax
import jax.numpy as jnp
from jax.experimental import pallas as pl
from jax.experimental.pallas import tpu as pltpu


def _round_up(x, m):
    return -(-x // m) * m


def _atrconv_bn_relu_kernel(x_ref, w_ref, b_ref, o_ref, patches_ref,
                            *, K, dil, Wp, HWp, Cin_p):
    """One batch element per grid step.

    x_ref:       (1, Cin_p, Lp)    flattened, zero-padded input rows (f32)
    w_ref:       (Cout_p, KKCp)    BN-scale-folded weights, bf16,
                                   rows in (tap, cin) order, zero-padded
    b_ref:       (Cout_p, 1)       folded BN bias (f32)
    o_ref:       (1, Cout_p, HWp)  lane-dense output (H * Wp columns)
    patches_ref: (KKCp, HWp)       bf16 VMEM scratch: im2col patch matrix
    """
    x = x_ref[0]                                     # (Cin_p, Lp), f32

    KK = K * K
    n_pairs = (KK + 1) // 2                          # taps written 2-at-a-time
    for g in range(n_pairs):
        t0, t1 = 2 * g, 2 * g + 1
        off0 = ((t0 // K) * Wp + (t0 % K)) * dil
        a = x[:, off0:off0 + HWp]                    # (Cin_p, HWp)
        if t1 < KK:
            off1 = ((t1 // K) * Wp + (t1 % K)) * dil
            b = x[:, off1:off1 + HWp]
        else:
            b = jnp.zeros_like(a)                    # padded zero tap
        # 2*Cin_p = 16 rows: one full packed-bf16 (16,128) tile per lane tile,
        # sublane-aligned, unmasked store.
        patches_ref[2 * Cin_p * g:2 * Cin_p * (g + 1), :] = (
            jnp.concatenate([a, b], axis=0).astype(jnp.bfloat16))

    # One MXU contraction over all taps:
    # (Cout_p, KKCp) x (KKCp, HWp) -> (Cout_p, HWp), f32 accumulation.
    y = jnp.dot(w_ref[...], patches_ref[...],
                preferred_element_type=jnp.float32)
    # Fused BN bias (scale already folded into weights) + ReLU.
    y = y + b_ref[...]                               # (Cout_p, 1) broadcast
    o_ref[0] = jnp.maximum(y, 0.0).astype(o_ref.dtype)


def atr_conv_block(x_nchw, weight_oihw, gamma, beta, running_mean, running_var,
                   *, kernel_size=5, stride=1, dilation=2, eps=1e-5):
    """Pallas implementation of atrConvBlock.forward (inference semantics).

    x_nchw:      (N, Cin, H, W)     float32
    weight_oihw: (Cout, Cin, K, K)  float32   (PyTorch Conv2d weight layout)
    returns:     (N, Cout, H, W)    float32
    """
    assert stride == 1, "atrConvBlock default stride=1 is what is implemented"
    K = kernel_size
    assert K % 2 == 1, "'same' padding formula (K-1)//2*dil requires odd K"
    N, Cin, H, W = x_nchw.shape
    Cout = weight_oihw.shape[0]
    pad = (K - 1) // 2 * dilation

    Cin_p = _round_up(Cin, 8)        # sublane-aligned channel dim
    Cout_p = _round_up(Cout, 8)      # sublane-aligned output channel dim
    Wp = W + 2 * pad
    Hp = H + 2 * pad
    HWp = H * Wp                     # output columns per image (W-padded rows)
    KK = K * K
    KK_p = _round_up(KK, 2)          # pair taps -> full 16-row bf16 tiles
    KKCp = KK_p * Cin_p

    # Every tap slice [off, off+HWp) must be in bounds; add extra bottom rows
    # to the single spatial pad instead of a second flat-tail pad.
    max_off = ((K - 1) * Wp + (K - 1)) * dilation
    extra_rows = max(0, -(-(max_off + HWp - Hp * Wp) // Wp))
    Lp = (Hp + extra_rows) * Wp

    # --- wrapper glue (one pad, free contiguous reshapes, no transposes of
    # activations) -----------------------------------------------------------
    x_pad = jnp.pad(
        x_nchw.astype(jnp.float32),
        ((0, 0), (0, Cin_p - Cin), (pad, pad + extra_rows), (pad, pad)))
    x_flat = x_pad.reshape(N, Cin_p, Lp)

    # Fold eval-mode BN scale into the conv weights; keep bias separate (f32).
    scale = (gamma / jnp.sqrt(running_var + eps)).astype(jnp.float32)
    bias = (beta - running_mean * scale).astype(jnp.float32)
    bias = jnp.pad(bias, (0, Cout_p - Cout)).reshape(Cout_p, 1)

    w_folded = weight_oihw.astype(jnp.float32) * scale[:, None, None, None]
    # (Cout, Cin, K, K) -> (Cout, K*K, Cin); zero-pad taps (25->26), channels
    # (Cin->Cin_p) and output channels (Cout->Cout_p); flatten to (tap, cin)
    # row order matching the patch matrix; cast to bf16 for the MXU.
    w_t = jnp.transpose(w_folded, (0, 2, 3, 1)).reshape(Cout, KK, Cin)
    w_t = jnp.pad(w_t, ((0, Cout_p - Cout), (0, KK_p - KK), (0, Cin_p - Cin)))
    w2d = w_t.reshape(Cout_p, KKCp).astype(jnp.bfloat16)

    kernel = functools.partial(_atrconv_bn_relu_kernel,
                               K=K, dil=dilation, Wp=Wp, HWp=HWp, Cin_p=Cin_p)

    out_flat = pl.pallas_call(
        kernel,
        out_shape=jax.ShapeDtypeStruct((N, Cout_p, HWp), x_nchw.dtype),
        grid_spec=pltpu.PrefetchScalarGridSpec(
            num_scalar_prefetch=0,
            grid=(N,),
            in_specs=[
                pl.BlockSpec((1, Cin_p, Lp), lambda n: (n, 0, 0)),
                pl.BlockSpec((Cout_p, KKCp), lambda n: (0, 0)),
                pl.BlockSpec((Cout_p, 1), lambda n: (0, 0)),
            ],
            out_specs=pl.BlockSpec((1, Cout_p, HWp), lambda n: (n, 0, 0)),
            scratch_shapes=[pltpu.VMEM((KKCp, HWp), jnp.bfloat16)],
        ),
        compiler_params=pltpu.CompilerParams(
            dimension_semantics=("parallel",)),
    )(x_flat, w2d, bias)

    # (N, Cout_p, H*Wp) -> (N, Cout_p, H, Wp) is a free contiguous reshape;
    # the padded channels and the Wp-W garbage columns per row are cropped.
    out = out_flat.reshape(N, Cout_p, H, Wp)[:, :Cout, :, :W]
    return out


def _reference(x_nchw, weight_oihw, gamma, beta, running_mean, running_var,
               *, dilation=2, eps=1e-5):
    """Pure-JAX f32 reference (eval-mode BN), NCHW like PyTorch."""
    pad = (weight_oihw.shape[-1] - 1) // 2 * dilation
    y = jax.lax.conv_general_dilated(
        x_nchw, weight_oihw,
        window_strides=(1, 1),
        padding=[(pad, pad), (pad, pad)],
        rhs_dilation=(dilation, dilation),
        dimension_numbers=("NCHW", "OIHW", "NCHW"))
    scale = gamma / jnp.sqrt(running_var + eps)
    bias = beta - running_mean * scale
    y = y * scale[None, :, None, None] + bias[None, :, None, None]
    return jnp.maximum(y, 0.0)


if __name__ == "__main__":
    key = jax.random.PRNGKey(0)
    k_x, k_w, k_g, k_b, k_m, k_v = jax.random.split(key, 6)

    # Small shapes consistent with the module: in_channels=4, out_channels=8.
    N, Cin, Cout, H, W, K = 2, 4, 8, 16, 16, 5

    x = jax.random.normal(k_x, (N, Cin, H, W), dtype=jnp.float32)
    weight = jax.random.normal(k_w, (Cout, Cin, K, K), dtype=jnp.float32) * 0.1
    gamma = 1.0 + 0.1 * jax.random.normal(k_g, (Cout,), dtype=jnp.float32)
    beta = 0.1 * jax.random.normal(k_b, (Cout,), dtype=jnp.float32)
    running_mean = 0.1 * jax.random.normal(k_m, (Cout,), dtype=jnp.float32)
    running_var = 1.0 + 0.1 * jax.random.uniform(k_v, (Cout,), dtype=jnp.float32)

    out = atr_conv_block(x, weight, gamma, beta, running_mean, running_var,
                         kernel_size=K, stride=1, dilation=2)
    out = jax.block_until_ready(out)

    ref = _reference(x, weight, gamma, beta, running_mean, running_var,
                     dilation=2)
    assert out.shape == (N, Cout, H, W)
    # bf16 patches/weights with f32 accumulation: tolerance loosened vs the
    # pure-f32 reference (100-term contraction, output values O(1)).
    max_err = float(jnp.max(jnp.abs(out - ref)))
    assert jnp.allclose(out, ref, atol=5e-2, rtol=5e-2), (
        f"mismatch vs reference: max abs diff {max_err}")

    print("KERNEL_OK")
</pallas_src>

<mosaic_0001>
module attributes {stable_mosaic.version = 11 : i64} {
  func.func @_atrconv_bn_relu_kernel(%arg0: i32, %arg1: memref<1x8x600xf32, #tpu.memory_space<vmem>>, %arg2: memref<8x208xbf16, #tpu.memory_space<vmem>>, %arg3: memref<8x1xf32, #tpu.memory_space<vmem>>, %arg4: memref<1x8x384xf32, #tpu.memory_space<vmem>>, %arg5: memref<208x384xbf16, #tpu.memory_space<vmem>>) attributes {dimension_semantics = [#tpu.dimension_semantics<parallel>], iteration_bounds = array<i64: 2>, scalar_prefetch = 0 : i64, scratch_operands = 1 : i64, tpu.core_type = #tpu.core_type<tc>, window_params = [{transform_indices = @transform_0, window_bounds = array<i64: 1, 8, 600>}, {pipeline_mode = #tpu.pipeline_mode<synchronous>, transform_indices = @transform_1, window_bounds = array<i64: 8, 208>}, {pipeline_mode = #tpu.pipeline_mode<synchronous>, transform_indices = @transform_2, window_bounds = array<i64: 8, 1>}, {transform_indices = @transform_3, window_bounds = array<i64: 1, 8, 384>}]} {
    %c0 = arith.constant 0 : index
    %c0_0 = arith.constant 0 : index
    %c0_1 = arith.constant 0 : index
    %0 = vector.load %arg1[%c0, %c0_0, %c0_1] : memref<1x8x600xf32, #tpu.memory_space<vmem>>, vector<1x8x600xf32>
    %1 = vector.shape_cast %0 : vector<1x8x600xf32> to vector<8x600xf32>
    %2 = vector.extract_strided_slice %1 {offsets = [0, 0], sizes = [8, 384], strides = [1, 1]} : vector<8x600xf32> to vector<8x384xf32>
    %3 = vector.extract_strided_slice %1 {offsets = [0, 2], sizes = [8, 384], strides = [1, 1]} : vector<8x600xf32> to vector<8x384xf32>
    %4 = tpu.concatenate %2, %3 in 0 : vector<8x384xf32>, vector<8x384xf32> -> vector<16x384xf32>
    %5 = arith.truncf %4 : vector<16x384xf32> to vector<16x384xbf16>
    %c0_2 = arith.constant 0 : index
    %c0_3 = arith.constant 0 : index
    %6 = vector.load %arg5[%c0_2, %c0_3] : memref<208x384xbf16, #tpu.memory_space<vmem>>, vector<16x384xbf16>
    tpu.vector_store %arg5[%c0_2, %c0_3], %5 {strides = array<i32>} : memref<208x384xbf16, #tpu.memory_space<vmem>>, vector<16x384xbf16>,
    %7 = vector.extract_strided_slice %1 {offsets = [0, 4], sizes = [8, 384], strides = [1, 1]} : vector<8x600xf32> to vector<8x384xf32>
    %8 = vector.extract_strided_slice %1 {offsets = [0, 6], sizes = [8, 384], strides = [1, 1]} : vector<8x600xf32> to vector<8x384xf32>
    %9 = tpu.concatenate %7, %8 in 0 : vector<8x384xf32>, vector<8x384xf32> -> vector<16x384xf32>
    %10 = arith.truncf %9 : vector<16x384xf32> to vector<16x384xbf16>
    %c16 = arith.constant 16 : index
    %c0_4 = arith.constant 0 : index
    %11 = vector.load %arg5[%c16, %c0_4] : memref<208x384xbf16, #tpu.memory_space<vmem>>, vector<16x384xbf16>
    tpu.vector_store %arg5[%c16, %c0_4], %10 {strides = array<i32>} : memref<208x384xbf16, #tpu.memory_space<vmem>>, vector<16x384xbf16>,
    %12 = vector.extract_strided_slice %1 {offsets = [0, 8], sizes = [8, 384], strides = [1, 1]} : vector<8x600xf32> to vector<8x384xf32>
    %13 = vector.extract_strided_slice %1 {offsets = [0, 48], sizes = [8, 384], strides = [1, 1]} : vector<8x600xf32> to vector<8x384xf32>
    %14 = tpu.concatenate %12, %13 in 0 : vector<8x384xf32>, vector<8x384xf32> -> vector<16x384xf32>
    %15 = arith.truncf %14 : vector<16x384xf32> to vector<16x384xbf16>
    %c32 = arith.constant 32 : index
    %c0_5 = arith.constant 0 : index
    %16 = vector.load %arg5[%c32, %c0_5] : memref<208x384xbf16, #tpu.memory_space<vmem>>, vector<16x384xbf16>
    tpu.vector_store %arg5[%c32, %c0_5], %15 {strides = array<i32>} : memref<208x384xbf16, #tpu.memory_space<vmem>>, vector<16x384xbf16>,
    %17 = vector.extract_strided_slice %1 {offsets = [0, 50], sizes = [8, 384], strides = [1, 1]} : vector<8x600xf32> to vector<8x384xf32>
    %18 = vector.extract_strided_slice %1 {offsets = [0, 52], sizes = [8, 384], strides = [1, 1]} : vector<8x600xf32> to vector<8x384xf32>
    %19 = tpu.concatenate %17, %18 in 0 : vector<8x384xf32>, vector<8x384xf32> -> vector<16x384xf32>
    %20 = arith.truncf %19 : vector<16x384xf32> to vector<16x384xbf16>
    %c48 = arith.constant 48 : index
    %c0_6 = arith.constant 0 : index
    %21 = vector.load %arg5[%c48, %c0_6] : memref<208x384xbf16, #tpu.memory_space<vmem>>, vector<16x384xbf16>
    tpu.vector_store %arg5[%c48, %c0_6], %20 {strides = array<i32>} : memref<208x384xbf16, #tpu.memory_space<vmem>>, vector<16x384xbf16>,
    %22 = vector.extract_strided_slice %1 {offsets = [0, 54], sizes = [8, 384], strides = [1, 1]} : vector<8x600xf32> to vector<8x384xf32>
    %23 = vector.extract_strided_slice %1 {offsets = [0, 56], sizes = [8, 384], strides = [1, 1]} : vector<8x600xf32> to vector<8x384xf32>
    %24 = tpu.concatenate %22, %23 in 0 : vector<8x384xf32>, vector<8x384xf32> -> vector<16x384xf32>
    %25 = arith.truncf %24 : vector<16x384xf32> to vector<16x384xbf16>
    %c64 = arith.constant 64 : index
    %c0_7 = arith.constant 0 : index
    %26 = vector.load %arg5[%c64, %c0_7] : memref<208x384xbf16, #tpu.memory_space<vmem>>, vector<16x384xbf16>
    tpu.vector_store %arg5[%c64, %c0_7], %25 {strides = array<i32>} : memref<208x384xbf16, #tpu.memory_space<vmem>>, vector<16x384xbf16>,
    %27 = vector.extract_strided_slice %1 {offsets = [0, 96], sizes = [8, 384], strides = [1, 1]} : vector<8x600xf32> to vector<8x384xf32>
    %28 = vector.extract_strided_slice %1 {offsets = [0, 98], sizes = [8, 384], strides = [1, 1]} : vector<8x600xf32> to vector<8x384xf32>
    %29 = tpu.concatenate %27, %28 in 0 : vector<8x384xf32>, vector<8x384xf32> -> vector<16x384xf32>
    %30 = arith.truncf %29 : vector<16x384xf32> to vector<16x384xbf16>
    %c80 = arith.constant 80 : index
    %c0_8 = arith.constant 0 : index
    %31 = vector.load %arg5[%c80, %c0_8] : memref<208x384xbf16, #tpu.memory_space<vmem>>, vector<16x384xbf16>
    tpu.vector_store %arg5[%c80, %c0_8], %30 {strides = array<i32>} : memref<208x384xbf16, #tpu.memory_space<vmem>>, vector<16x384xbf16>,
    %32 = vector.extract_strided_slice %1 {offsets = [0, 100], sizes = [8, 384], strides = [1, 1]} : vector<8x600xf32> to vector<8x384xf32>
    %33 = vector.extract_strided_slice %1 {offsets = [0, 102], sizes = [8, 384], strides = [1, 1]} : vector<8x600xf32> to vector<8x384xf32>
    %34 = tpu.concatenate %32, %33 in 0 : vector<8x384xf32>, vector<8x384xf32> -> vector<16x384xf32>
    %35 = arith.truncf %34 : vector<16x384xf32> to vector<16x384xbf16>
    %c96 = arith.constant 96 : index
    %c0_9 = arith.constant 0 : index
    %36 = vector.load %arg5[%c96, %c0_9] : memref<208x384xbf16, #tpu.memory_space<vmem>>, vector<16x384xbf16>
    tpu.vector_store %arg5[%c96, %c0_9], %35 {strides = array<i32>} : memref<208x384xbf16, #tpu.memory_space<vmem>>, vector<16x384xbf16>,
    %37 = vector.extract_strided_slice %1 {offsets = [0, 104], sizes = [8, 384], strides = [1, 1]} : vector<8x600xf32> to vector<8x384xf32>
    %38 = vector.extract_strided_slice %1 {offsets = [0, 144], sizes = [8, 384], strides = [1, 1]} : vector<8x600xf32> to vector<8x384xf32>
    %39 = tpu.concatenate %37, %38 in 0 : vector<8x384xf32>, vector<8x384xf32> -> vector<16x384xf32>
    %40 = arith.truncf %39 : vector<16x384xf32> to vector<16x384xbf16>
    %c112 = arith.constant 112 : index
    %c0_10 = arith.constant 0 : index
    %41 = vector.load %arg5[%c112, %c0_10] : memref<208x384xbf16, #tpu.memory_space<vmem>>, vector<16x384xbf16>
    tpu.vector_store %arg5[%c112, %c0_10], %40 {strides = array<i32>} : memref<208x384xbf16, #tpu.memory_space<vmem>>, vector<16x384xbf16>,
    %42 = vector.extract_strided_slice %1 {offsets = [0, 146], sizes = [8, 384], strides = [1, 1]} : vector<8x600xf32> to vector<8x384xf32>
    %43 = vector.extract_strided_slice %1 {offsets = [0, 148], sizes = [8, 384], strides = [1, 1]} : vector<8x600xf32> to vector<8x384xf32>
    %44 = tpu.concatenate %42, %43 in 0 : vector<8x384xf32>, vector<8x384xf32> -> vector<16x384xf32>
    %45 = arith.truncf %44 : vector<16x384xf32> to vector<16x384xbf16>
    %c128 = arith.constant 128 : index
    %c0_11 = arith.constant 0 : index
    %46 = vector.load %arg5[%c128, %c0_11] : memref<208x384xbf16, #tpu.memory_space<vmem>>, vector<16x384xbf16>
    tpu.vector_store %arg5[%c128, %c0_11], %45 {strides = array<i32>} : memref<208x384xbf16, #tpu.memory_space<vmem>>, vector<16x384xbf16>,
    %47 = vector.extract_strided_slice %1 {offsets = [0, 150], sizes = [8, 384], strides = [1, 1]} : vector<8x600xf32> to vector<8x384xf32>
    %48 = vector.extract_strided_slice %1 {offsets = [0, 152], sizes = [8, 384], strides = [1, 1]} : vector<8x600xf32> to vector<8x384xf32>
    %49 = tpu.concatenate %47, %48 in 0 : vector<8x384xf32>, vector<8x384xf32> -> vector<16x384xf32>
    %50 = arith.truncf %49 : vector<16x384xf32> to vector<16x384xbf16>
    %c144 = arith.constant 144 : index
    %c0_12 = arith.constant 0 : index
    %51 = vector.load %arg5[%c144, %c0_12] : memref<208x384xbf16, #tpu.memory_space<vmem>>, vector<16x384xbf16>
    tpu.vector_store %arg5[%c144, %c0_12], %50 {strides = array<i32>} : memref<208x384xbf16, #tpu.memory_space<vmem>>, vector<16x384xbf16>,
    %52 = vector.extract_strided_slice %1 {offsets = [0, 192], sizes = [8, 384], strides = [1, 1]} : vector<8x600xf32> to vector<8x384xf32>
    %53 = vector.extract_strided_slice %1 {offsets = [0, 194], sizes = [8, 384], strides = [1, 1]} : vector<8x600xf32> to vector<8x384xf32>
    %54 = tpu.concatenate %52, %53 in 0 : vector<8x384xf32>, vector<8x384xf32> -> vector<16x384xf32>
    %55 = arith.truncf %54 : vector<16x384xf32> to vector<16x384xbf16>
    %c160 = arith.constant 160 : index
    %c0_13 = arith.constant 0 : index
    %56 = vector.load %arg5[%c160, %c0_13] : memref<208x384xbf16, #tpu.memory_space<vmem>>, vector<16x384xbf16>
    tpu.vector_store %arg5[%c160, %c0_13], %55 {strides = array<i32>} : memref<208x384xbf16, #tpu.memory_space<vmem>>, vector<16x384xbf16>,
    %57 = vector.extract_strided_slice %1 {offsets = [0, 196], sizes = [8, 384], strides = [1, 1]} : vector<8x600xf32> to vector<8x384xf32>
    %58 = vector.extract_strided_slice %1 {offsets = [0, 198], sizes = [8, 384], strides = [1, 1]} : vector<8x600xf32> to vector<8x384xf32>
    %59 = tpu.concatenate %57, %58 in 0 : vector<8x384xf32>, vector<8x384xf32> -> vector<16x384xf32>
    %60 = arith.truncf %59 : vector<16x384xf32> to vector<16x384xbf16>
    %c176 = arith.constant 176 : index
    %c0_14 = arith.constant 0 : index
    %61 = vector.load %arg5[%c176, %c0_14] : memref<208x384xbf16, #tpu.memory_space<vmem>>, vector<16x384xbf16>
    tpu.vector_store %arg5[%c176, %c0_14], %60 {strides = array<i32>} : memref<208x384xbf16, #tpu.memory_space<vmem>>, vector<16x384xbf16>,
    %62 = vector.extract_strided_slice %1 {offsets = [0, 200], sizes = [8, 384], strides = [1, 1]} : vector<8x600xf32> to vector<8x384xf32>
    %cst = arith.constant 0.000000e+00 : f32
    %63 = vector.broadcast %cst : f32 to vector<8x384xf32>
    %64 = tpu.concatenate %62, %63 in 0 : vector<8x384xf32>, vector<8x384xf32> -> vector<16x384xf32>
    %65 = arith.truncf %64 : vector<16x384xf32> to vector<16x384xbf16>
    %c192 = arith.constant 192 : index
    %c0_15 = arith.constant 0 : index
    %66 = vector.load %arg5[%c192, %c0_15] : memref<208x384xbf16, #tpu.memory_space<vmem>>, vector<16x384xbf16>
    tpu.vector_store %arg5[%c192, %c0_15], %65 {strides = array<i32>} : memref<208x384xbf16, #tpu.memory_space<vmem>>, vector<16x384xbf16>,
    %c0_16 = arith.constant 0 : index
    %c0_17 = arith.constant 0 : index
    %67 = vector.load %arg2[%c0_16, %c0_17] : memref<8x208xbf16, #tpu.memory_space<vmem>>, vector<8x208xbf16>
    %c0_18 = arith.constant 0 : index
    %c0_19 = arith.constant 0 : index
    %68 = vector.load %arg5[%c0_18, %c0_19] : memref<208x384xbf16, #tpu.memory_space<vmem>>, vector<208x384xbf16>
    %cst_20 = arith.constant dense<0.000000e+00> : vector<8x384xf32>
    %69 = tpu.matmul %67, %68, %cst_20 {dimension_numbers = #tpu.dot_dimension_numbers<[1], [0], [0], [1], [0, 0, 1, 1], [], []>} : vector<8x208xbf16>, vector<208x384xbf16>, vector<8x384xf32> -> vector<8x384xf32>
    %c0_21 = arith.constant 0 : index
    %c0_22 = arith.constant 0 : index
    %70 = vector.load %arg3[%c0_21, %c0_22] : memref<8x1xf32, #tpu.memory_space<vmem>>, vector<8x1xf32>
    %71 = vector.broadcast %70 : vector<8x1xf32> to vector<8x384xf32>
    %72 = arith.addf %69, %71 : vector<8x384xf32>
    %cst_23 = arith.constant 0.000000e+00 : f32
    %73 = vector.broadcast %cst_23 : f32 to vector<8x384xf32>
    %74 = arith.maximumf %72, %73 : vector<8x384xf32>
    %c0_24 = arith.constant 0 : index
    %c0_25 = arith.constant 0 : index
    %c0_26 = arith.constant 0 : index
    %75 = vector.load %arg4[%c0_24, %c0_25, %c0_26] : memref<1x8x384xf32, #tpu.memory_space<vmem>>, vector<1x8x384xf32>
    %76 = vector.shape_cast %75 : vector<1x8x384xf32> to vector<8x384xf32>
    %77 = vector.shape_cast %74 : vector<8x384xf32> to vector<1x8x384xf32>
    tpu.vector_store %arg4[%c0_24, %c0_25, %c0_26], %77 {strides = array<i32>} : memref<1x8x384xf32, #tpu.memory_space<vmem>>, vector<1x8x384xf32>,
    return
  }
  func.func @transform_0(%arg0: i32) -> (i32, i32, i32) {
    %c0_i32 = arith.constant 0 : i32
    %c0_i32_0 = arith.constant 0 : i32
    %c0_i32_1 = arith.constant 0 : i32
    return %arg0, %c0_i32, %c0_i32_0 : i32, i32, i32
  }
  func.func @transform_1(%arg0: i32) -> (i32, i32) {
    %c0_i32 = arith.constant 0 : i32
    %c0_i32_0 = arith.constant 0 : i32
    %c0_i32_1 = arith.constant 0 : i32
    return %c0_i32, %c0_i32_0 : i32, i32
  }
  func.func @transform_2(%arg0: i32) -> (i32, i32) {
    %c0_i32 = arith.constant 0 : i32
    %c0_i32_0 = arith.constant 0 : i32
    %c0_i32_1 = arith.constant 0 : i32
    return %c0_i32, %c0_i32_0 : i32, i32
  }
  func.func @transform_3(%arg0: i32) -> (i32, i32, i32) {
    %c0_i32 = arith.constant 0 : i32
    %c0_i32_0 = arith.constant 0 : i32
    %c0_i32_1 = arith.constant 0 : i32
    return %arg0, %c0_i32, %c0_i32_0 : i32, i32, i32
  }
}

</mosaic_0001>

<llo_original>
// kernel: tpu_custom_call.1
$region0: #{tpu_custom_call.1}
  #allocation0 [shape = 'u32[]', space=smem, size = 0x4, offset = 0x4, fixed_abs, tag = 'smem constant byte address 0x4 - core index']
  #allocation1 [shape = 'u32[144,128]{1,0:T(1,128)}', space=vmem, size = 0x12000, scoped, tag = 'internal scratch']
  #allocation2 [shape = 'bf16[208,384]{1,0:T(8,128)(2,1)}', space=vmem, size = 0x27000, scoped, tag = 'scratch operand']
  %s0 = inlined_call_operand.hbm [shape: f32[2,8,600], index: 0, kind: input, shape index: {}]
  %s1 = inlined_call_operand.vmem [shape: bf16[8,208], index: 1, kind: input, shape index: {}]
  %s2 = inlined_call_operand.vmem [shape: f32[8,1], index: 2, kind: input, shape index: {}]
  %s3 = inlined_call_operand.hbm [shape: f32[2,8,384], index: 3, kind: output, shape index: {}]
  %s4 = sld [smem:[#allocation0]]
  $region49: #{tpu_custom_call.1} parent=0
    _
  %s6 = ssub.s32 1, %s4
  %s7 = scalar_select 0, %s6, %s4
  $region1: #{tpu_custom_call.1} parent=0
    #allocation3 [shape = 'u8[40960]{0}', space=vmem, size = 0xa000, scoped, tag = 'input window, operand 0']
    #allocation4 [shape = 's32[2]{0}', space=sflag, size = 0x8, scoped, tag = 'scoped memory for tpu_custom_call.1']
    #allocation5 [shape = 's32[2]{0}', space=sflag, size = 0x8, scoped, tag = 'scoped memory for tpu_custom_call.1']
    #allocation6 [shape = 'u8[24576]{0}', space=vmem, size = 0x6000, scoped, tag = 'output window, operand 0']
    %8 = vsyncpa [#allocation4], 0
    %s9 = scalar_lea.sflag [#allocation4], 1
    %10 = vsyncpa %s9, 0
    %11 = vsyncpa [#allocation5], 0
    %s12 = scalar_lea.sflag [#allocation5], 1
    %13 = vsyncpa %s12, 0
    loop: start=0, step=1, limit=4
    $region2: #{tpu_custom_call.1} parent=1 // loop_pre_header
      _
    $region3: #{tpu_custom_call.1} parent=1 // loop_header
      %s15 = sphi 0, %s19
      %p16 = scmp.ge.s32.totalorder %s15, 4
      %s25 = sphi 0, %s27
      %s28 = sphi 0, %s25
      %s29 = sphi 0, %s28
      %s45 = sphi 0, %s29
      %s49 = sphi 0, %s49
      %s51 = sphi 0, %s49
      %s52 = sphi 0, %s51
      %s66 = sphi 0, %s52
      %s70 = sphi 0, %s70
      %s72 = sphi 0, %s70
      %s73 = sphi 0, %s72
      %s87 = sphi 0, %s73
      %s93 = sphi 0, %s95
      %s96 = sphi 0, %s93
      %s97 = sphi 0, %s96
      %s113 = sphi 0, %s97
    $region4: #{tpu_custom_call.1} parent=1 // loop_header_branch
      %18 = sbr.rel (%p16) target = $region8
    $region5: #{tpu_custom_call.1} parent=1 // loop_body
      %s20 = ssub.s32 %s15, 1
      %s21 = ssub.s32 %s15, 2
      %s22 = sadd.s32 %s15, 1
      %s23 = ssub.s32 %s15, %s22
      %p24 = scmp.eq.s32.totalorder %s23, 0
      %s26 = sadd.s32 %s25, 1
      %s27 = scalar_select %p24, %s25, %s26
      %p30 = pneg %p24
      %p31 = scmp.eq.s32.totalorder %s15, 1
      %p32 = por %p30, %p31
      %p33 = scmp.ne.s32.totalorder %s25, %s28
      %p34 = scmp.eq.s32.totalorder %s15, 0
      %p35 = por %p33, %p34
      %p36 = scmp.ne.s32.totalorder %s25, %s28
      %p37 = scmp.eq.s32.totalorder %s20, 1
      %p38 = por %p36, %p37
      %p39 = scmp.ne.s32.totalorder %s28, %s29
      %p40 = scmp.eq.s32.totalorder %s20, 0
      %p41 = por %p39, %p40
      %p42 = scmp.ne.s32.totalorder %s28, %s29
      %p43 = scmp.eq.s32.totalorder %s21, 1
      %p44 = por %p42, %p43
      %p46 = scmp.ne.s32.totalorder %s29, %s45
      %p47 = scmp.eq.s32.totalorder %s21, 0
      %p48 = por %p46, %p47
      %s50 = sadd.s32 %s49, 1
      %p53 = scmp.eq.s32.totalorder %s15, 1
      %p54 = scmp.ne.s32.totalorder %s49, %s51
      %p55 = scmp.eq.s32.totalorder %s15, 0
      %p56 = por %p54, %p55
      %p57 = scmp.ne.s32.totalorder %s49, %s51
      %p58 = scmp.eq.s32.totalorder %s20, 1
      %p59 = por %p57, %p58
      %p60 = scmp.ne.s32.totalorder %s51, %s52
      %p61 = scmp.eq.s32.totalorder %s20, 0
      %p62 = por %p60, %p61
      %p63 = scmp.ne.s32.totalorder %s51, %s52
      %p64 = scmp.eq.s32.totalorder %s21, 1
      %p65 = por %p63, %p64
      %p67 = scmp.ne.s32.totalorder %s52, %s66
      %p68 = scmp.eq.s32.totalorder %s21, 0
      %p69 = por %p67, %p68
      %s71 = sadd.s32 %s70, 1
      %p74 = scmp.eq.s32.totalorder %s15, 1
      %p75 = scmp.ne.s32.totalorder %s70, %s72
      %p76 = scmp.eq.s32.totalorder %s15, 0
      %p77 = por %p75, %p76
      %p78 = scmp.ne.s32.totalorder %s70, %s72
      %p79 = scmp.eq.s32.totalorder %s20, 1
      %p80 = por %p78, %p79
      %p81 = scmp.ne.s32.totalorder %s72, %s73
      %p82 = scmp.eq.s32.totalorder %s20, 0
      %p83 = por %p81, %p82
      %p84 = scmp.ne.s32.totalorder %s72, %s73
      %p85 = scmp.eq.s32.totalorder %s21, 1
      %p86 = por %p84, %p85
      %p88 = scmp.ne.s32.totalorder %s73, %s87
      %p89 = scmp.eq.s32.totalorder %s21, 0
      %p90 = por %p88, %p89
      %s91 = ssub.s32 %s15, %s22
      %p92 = scmp.eq.s32.totalorder %s91, 0
      %s94 = sadd.s32 %s93, 1
      %s95 = scalar_select %p92, %s93, %s94
      %p98 = pneg %p92
      %p99 = scmp.eq.s32.totalorder %s15, 1
      %p100 = por %p98, %p99
      %p101 = scmp.ne.s32.totalorder %s93, %s96
      %p102 = scmp.eq.s32.totalorder %s15, 0
      %p103 = por %p101, %p102
      %p104 = scmp.ne.s32.totalorder %s93, %s96
      %p105 = scmp.eq.s32.totalorder %s20, 1
      %p106 = por %p104, %p105
      %p107 = scmp.ne.s32.totalorder %s96, %s97
      %p108 = scmp.eq.s32.totalorder %s20, 0
      %p109 = por %p107, %p108
      %p110 = scmp.ne.s32.totalorder %s96, %s97
      %p111 = scmp.eq.s32.totalorder %s21, 1
      %p112 = por %p110, %p111
      %p114 = scmp.ne.s32.totalorder %s97, %s113
      %p115 = scmp.eq.s32.totalorder %s21, 0
      %p116 = por %p114, %p115
      %p117 = scmp.le.s32.totalorder 1, %s15
      %p118 = scmp.lt.s32.totalorder %s15, 3
      %p119 = pnand %p117, %p118
      %p120 = pneg %p119
      // Predicated region
      $region9: #{tpu_custom_call.1} parent=5 // pred_check
        _
      $region10: #{tpu_custom_call.1} parent=5 // pred_check_branch
        %122 = sbr.rel (%p119) target = $region12
      $region11: #{tpu_custom_call.1} parent=5 // pred_region
        %s123 = ssub.s32 %s15, 1
        // Predicated region
        $region13: #{tpu_custom_call.1} parent=11 // pred_check
          %p124 = pneg %p62
        $region14: #{tpu_custom_call.1} parent=11 // pred_check_branch
          %126 = sbr.rel (%p124) target = $region16
        $region15: #{tpu_custom_call.1} parent=11 // pred_region
          _
        $region16: #{tpu_custom_call.1} parent=11 // pred_fallthru
          _
        // Predicated region
        $region17: #{tpu_custom_call.1} parent=11 // pred_check
          %p127 = pneg %p83
        $region18: #{tpu_custom_call.1} parent=11 // pred_check_branch
          %129 = sbr.rel (%p127) target = $region20
        $region19: #{tpu_custom_call.1} parent=11 // pred_region
          _
        $region20: #{tpu_custom_call.1} parent=11 // pred_fallthru
          _
      $region12: #{tpu_custom_call.1} parent=5 // pred_fallthru
        _
      %p130 = scmp.lt.s32.totalorder %s15, 2
      // Predicated region
      $region21: #{tpu_custom_call.1} parent=5 // pred_check
        %p131 = pneg %p130
      $region22: #{tpu_custom_call.1} parent=5 // pred_check_branch
        %133 = sbr.rel (%p131) target = $region24
      $region23: #{tpu_custom_call.1} parent=5 // pred_region
        // Predicated region
        $region25: #{tpu_custom_call.1} parent=23 // pred_check
          %p134 = pneg %p35
        $region26: #{tpu_custom_call.1} parent=23 // pred_check_branch
          %136 = sbr.rel (%p134) target = $region28
        $region27: #{tpu_custom_call.1} parent=23 // pred_region
          %s137 = sand.u32 %s25, 1
          %s138 = scalar_lea.sflag [#allocation4], %s137
          %s139 = sand.u32 %s25, 1
          %s140 = smul.addr %s139, 40
          %s141 = scalar_lea.vmem [#allocation3], %s140
          %s143 = ssub.s32 640, 640
          %144 = vsyncadd %s138, %s143
          %s145 = smul.addr %s15, 5
          %s146 = smul.addr %s145, 128
          %s147 = scalar_lea.hbm %s0, %s146
          %s149 = sshll.u32 %s141, 4
          %s150 = int_to_ptr.vmem [resolvable:$true] %s149
          %152 = dma.hbm_to_vmem [thread:$0]  %s147, 640, %s150, %s138
        $region28: #{tpu_custom_call.1} parent=23 // pred_fallthru
          _
      $region24: #{tpu_custom_call.1} parent=5 // pred_fallthru
        _
      %p153 = scmp.le.s32.totalorder 1, %s15
      %p154 = scmp.lt.s32.totalorder %s15, 3
      %p155 = pnand %p153, %p154
      %p156 = pneg %p155
      // Predicated region
      $region29: #{tpu_custom_call.1} parent=5 // pred_check
        _
      $region30: #{tpu_custom_call.1} parent=5 // pred_check_branch
        %158 = sbr.rel (%p155) target = $region32
      $region31: #{tpu_custom_call.1} parent=5 // pred_region
        %s159 = ssub.s32 %s15, 1
        %s160 = sand.u32 %s28, 1
        %s161 = scalar_lea.sflag [#allocation4], %s160
        %s162 = sand.u32 %s28, 1
        %s163 = smul.addr %s162, 40
        %s164 = scalar_lea.vmem [#allocation3], %s163
        // Predicated region
        $region33: #{tpu_custom_call.1} parent=31 // pred_check
          %p165 = pneg %p41
        $region34: #{tpu_custom_call.1} parent=31 // pred_check_branch
          %167 = sbr.rel (%p165) target = $region36
        $region35: #{tpu_custom_call.1} parent=31 // pred_region
          %168 = dma.done %s161, 640
        $region36: #{tpu_custom_call.1} parent=31 // pred_fallthru
          _
        %s169 = sand.u32 %s28, 1
        %s170 = scalar_lea.sflag [#allocation4], %s169
        %s171 = sand.u32 %s28, 1
        %s172 = smul.addr %s171, 40
        %s173 = scalar_lea.vmem [#allocation3], %s172
        %p174 = pneg %p41
        %p175 = pneg %p38
        %p176 = pneg %p62
        %p177 = pneg %p59
        %p178 = pneg %p83
        %p179 = pneg %p80
        %p180 = pneg %p109
        %p181 = pneg %p106
        %s182 = sand.u32 %s96, 1
        %s183 = scalar_lea.sflag [#allocation5], %s182
        %s184 = sand.u32 %s96, 1
        %s185 = smul.addr %s184, 24
        %s186 = scalar_lea.vmem [#allocation6], %s185
        %v188 = vld [vmem:[%s164] sm:$0xff]
        %v189 = vld [vmem:[%s164 + $0x8] sm:$0xff]
        %v190 = vld [vmem:[%s164 + $0x10] sm:$0xff]
        %v191 = vld [vmem:[%s164 + $0x18] sm:$0xff]
        %v192 = vld [vmem:[%s164 + $0x20] sm:$0xff]
        %197 = vrot.lane.b32.xlu0 %v188, 126
        %v198 = vpop.permute.xlu0 %197
        %199 = vrot.lane.b32.xlu0 %v189, 126
        %v200 = vpop.permute.xlu0 %199
        %201 = vrot.lane.b32.xlu0 %v190, 126
        %v202 = vpop.permute.xlu0 %201
        %203 = vrot.lane.b32.xlu0 %v191, 126
        %v204 = vpop.permute.xlu0 %203
        %vm205 = vcmask 1031168
        %v206 = vsel %vm205, %v198, %v200
        %v207 = vsel %vm205, %v200, %v202
        %v208 = vsel %vm205, %v202, %v204
        %v212 = vpack.c.bf16 %v206, %v188
        %v213 = vpack.c.bf16 %v207, %v189
        %v214 = vpack.c.bf16 %v208, %v190
        %v218 = vunpack.c.l.b16 %v212
        %v219 = vunpack.c.l.b16 %v213
        %v220 = vunpack.c.l.b16 %v214
        %v221 = vunpack.c.h.b16 %v212
        %v222 = vunpack.c.h.b16 %v213
        %v223 = vunpack.c.h.b16 %v214
        %v224 = vpack.c.b16 %v219, %v218
        %v225 = vpack.c.b16 %v220, %v220
        %v226 = vpack.c.b16 %v222, %v221
        %v227 = vpack.c.b16 %v223, %v223
        %232 = vst [vmem:[#allocation2] sm:$0xff] %v224
        %233 = vst [vmem:[#allocation2 + $0x8] sm:$0xf] %v225
        %234 = vst [vmem:[#allocation2 + $0xc] sm:$0xff] %v226
        %235 = vst [vmem:[#allocation2 + $0x14] sm:$0xf] %v227
        %v237 = vpack.c.bf16 %v204, %v191
        %v239 = vunpack.c.l.b16 %v237
        %v240 = vunpack.c.h.b16 %v237
        %v241 = vpack.c.b16 %v239, %v220
        %v242 = vpack.c.b16 %v240, %v223
        %243 = vrot.lane.b32.xlu0 %v224, 124
        %v244 = vpop.permute.xlu0 %243
        %245 = vrot.lane.b32.xlu0 %v241, 124
        %v246 = vpop.permute.xlu0 %245
        %247 = vrot.lane.b32.xlu0 %v226, 124
        %v248 = vpop.permute.xlu0 %247
        %249 = vrot.lane.b32.xlu0 %v242, 124
        %v250 = vpop.permute.xlu0 %249
        %v251 = vrot.slane %v244, 4
        %v252 = vrot.slane %v246, 4
        %v253 = vrot.slane %v248, 4
        %v254 = vrot.slane %v250, 4
        %vm255 = vcmask 1043456
        %v256 = vsel %vm255, %v251, %v252
        %vm257 = vcmask 1014784
        %v258 = vsel %vm257, %v244, %v256
        %v259 = vsel %vm257, %v246, %v252
        %v260 = vsel %vm255, %v253, %v254
        %v261 = vsel %vm257, %v248, %v260
        %v262 = vsel %vm257, %v250, %v254
        %267 = vst [vmem:[#allocation2 + $0x18] sm:$0xff] %v258
        %268 = vst [vmem:[#allocation2 + $0x20] sm:$0xf] %v259
        %269 = vst [vmem:[#allocation2 + $0x24] sm:$0xff] %v261
        %270 = vst [vmem:[#allocation2 + $0x2c] sm:$0xf] %v262
        %271 = vrot.lane.b32.xlu0 %v188, 88
        %v272 = vpop.permute.xlu0 %271
        %273 = vrot.lane.b32.xlu0 %v189, 88
        %v274 = vpop.permute.xlu0 %273
        %275 = vrot.lane.b32.xlu0 %v190, 88
        %v276 = vpop.permute.xlu0 %275
        %277 = vrot.lane.b32.xlu0 %v191, 88
        %v278 = vpop.permute.xlu0 %277
        %vm279 = vcmask 719872
        %v280 = vsel %vm279, %v272, %v274
        %v281 = vsel %vm279, %v274, %v276
        %v282 = vsel %vm279, %v276, %v278
        %v287 = vpack.c.bf16 %v280, %v188
        %v288 = vpack.c.bf16 %v281, %v189
        %v289 = vpack.c.bf16 %v282, %v190
        %v290 = vpack.c.bf16 %v278, %v191
        %v295 = vunpack.c.l.b16 %v287
        %v296 = vunpack.c.l.b16 %v288
        %v297 = vunpack.c.l.b16 %v289
        %v298 = vunpack.c.l.b16 %v290
        %v299 = vunpack.c.h.b16 %v287
        %v300 = vunpack.c.h.b16 %v288
        %v301 = vunpack.c.h.b16 %v289
        %v302 = vunpack.c.h.b16 %v290
        %v303 = vpack.c.b16 %v296, %v295
        %v304 = vpack.c.b16 %v298, %v297
        %v305 = vpack.c.b16 %v300, %v299
        %v306 = vpack.c.b16 %v302, %v301
        %307 = vrot.lane.b32.xlu0 %v303, 120
        %v308 = vpop.permute.xlu0 %307
        %309 = vrot.lane.b32.xlu0 %v304, 120
        %v310 = vpop.permute.xlu0 %309
        %311 = vrot.lane.b32.xlu0 %v305, 120
        %v312 = vpop.permute.xlu0 %311
        %313 = vrot.lane.b32.xlu0 %v306, 120
        %v314 = vpop.permute.xlu0 %313
        %v315 = vrot.slane %v308, 4
        %v316 = vrot.slane %v310, 4
        %v317 = vrot.slane %v312, 4
        %v318 = vrot.slane %v314, 4
        %v319 = vsel %vm255, %v315, %v316
        %vm320 = vcmask 982016
        %v321 = vsel %vm320, %v308, %v319
        %v322 = vsel %vm320, %v310, %v316
        %v323 = vsel %vm255, %v317, %v318
        %v324 = vsel %vm320, %v312, %v323
        %v325 = vsel %vm320, %v314, %v318
        %330 = vst [vmem:[#allocation2 + $0x30] sm:$0xff] %v321
        %331 = vst [vmem:[#allocation2 + $0x38] sm:$0xf] %v322
        %332 = vst [vmem:[#allocation2 + $0x3c] sm:$0xff] %v324
        %333 = vst [vmem:[#allocation2 + $0x44] sm:$0xf] %v325
        %334 = vrot.lane.b32.xlu0 %v224, 78
        %v335 = vpop.permute.xlu0 %334
        %336 = vrot.lane.b32.xlu0 %v241, 78
        %v337 = vpop.permute.xlu0 %336
        %338 = vrot.lane.b32.xlu0 %v226, 78
        %v339 = vpop.permute.xlu0 %338
        %340 = vrot.lane.b32.xlu0 %v242, 78
        %v341 = vpop.permute.xlu0 %340
        %v342 = vrot.slane %v335, 4
        %v343 = vrot.slane %v337, 4
        %v344 = vrot.slane %v339, 4
        %v345 = vrot.slane %v341, 4
        %v346 = vsel %vm255, %v342, %v343
        %vm347 = vcmask 637952
        %v348 = vsel %vm347, %v335, %v346
        %v349 = vsel %vm347, %v337, %v343
        %v350 = vsel %vm255, %v344, %v345
        %v351 = vsel %vm347, %v339, %v350
        %v352 = vsel %vm347, %v341, %v345
        %357 = vst [vmem:[#allocation2 + $0x48] sm:$0xff] %v348
        %358 = vst [vmem:[#allocation2 + $0x50] sm:$0xf] %v349
        %359 = vst [vmem:[#allocation2 + $0x54] sm:$0xff] %v351
        %360 = vst [vmem:[#allocation2 + $0x5c] sm:$0xf] %v352
        %361 = vrot.lane.b32.xlu0 %v224, 74
        %v362 = vpop.permute.xlu0 %361
        %363 = vrot.lane.b32.xlu0 %v241, 74
        %v364 = vpop.permute.xlu0 %363
        %365 = vrot.lane.b32.xlu0 %v226, 74
        %v366 = vpop.permute.xlu0 %365
        %367 = vrot.lane.b32.xlu0 %v242, 74
        %v368 = vpop.permute.xlu0 %367
        %v369 = vrot.slane %v362, 4
        %v370 = vrot.slane %v364, 4
        %v371 = vrot.slane %v366, 4
        %v372 = vrot.slane %v368, 4
        %v373 = vsel %vm255, %v369, %v370
        %vm374 = vcmask 605184
        %v375 = vsel %vm374, %v362, %v373
        %v376 = vsel %vm374, %v364, %v370
        %v377 = vsel %vm255, %v371, %v372
        %v378 = vsel %vm374, %v366, %v377
        %v379 = vsel %vm374, %v368, %v372
        %384 = vst [vmem:[#allocation2 + $0x60] sm:$0xff] %v375
        %385 = vst [vmem:[#allocation2 + $0x68] sm:$0xf] %v376
        %386 = vst [vmem:[#allocation2 + $0x6c] sm:$0xff] %v378
        %387 = vst [vmem:[#allocation2 + $0x74] sm:$0xf] %v379
        %388 = vrot.lane.b32.xlu0 %v224, 32
        %v389 = vpop.permute.xlu0 %388
        %390 = vrot.lane.b32.xlu0 %v241, 32
        %v391 = vpop.permute.xlu0 %390
        %392 = vrot.lane.b32.xlu0 %v226, 32
        %v393 = vpop.permute.xlu0 %392
        %394 = vrot.lane.b32.xlu0 %v242, 32
        %v395 = vpop.permute.xlu0 %394
        %v396 = vrot.slane %v389, 4
        %v397 = vrot.slane %v391, 4
        %v398 = vrot.slane %v393, 4
        %v399 = vrot.slane %v395, 4
        %v400 = vsel %vm255, %v396, %v397
        %vm401 = vcmask 261120
        %v402 = vsel %vm401, %v389, %v400
        %v403 = vsel %vm401, %v391, %v397
        %v404 = vsel %vm255, %v398, %v399
        %v405 = vsel %vm401, %v393, %v404
        %v406 = vsel %vm401, %v395, %v399
        %411 = vst [vmem:[#allocation2 + $0x78] sm:$0xff] %v402
        %412 = vst [vmem:[#allocation2 + $0x80] sm:$0xf] %v403
        %413 = vst [vmem:[#allocation2 + $0x84] sm:$0xff] %v405
        %414 = vst [vmem:[#allocation2 + $0x8c] sm:$0xf] %v406
        %415 = vrot.lane.b32.xlu0 %v224, 28
        %v416 = vpop.permute.xlu0 %415
        %417 = vrot.lane.b32.xlu0 %v241, 28
        %v418 = vpop.permute.xlu0 %417
        %419 = vrot.lane.b32.xlu0 %v226, 28
        %v420 = vpop.permute.xlu0 %419
        %421 = vrot.lane.b32.xlu0 %v242, 28
        %v422 = vpop.permute.xlu0 %421
        %v423 = vrot.slane %v416, 4
        %v424 = vrot.slane %v418, 4
        %v425 = vrot.slane %v420, 4
        %v426 = vrot.slane %v422, 4
        %v427 = vsel %vm255, %v423, %v424
        %vm428 = vcmask 228352
        %v429 = vsel %vm428, %v416, %v427
        %v430 = vsel %vm428, %v418, %v424
        %v431 = vsel %vm255, %v425, %v426
        %v432 = vsel %vm428, %v420, %v431
        %v433 = vsel %vm428, %v422, %v426
        %438 = vst [vmem:[#allocation2 + $0x90] sm:$0xff] %v429
        %439 = vst [vmem:[#allocation2 + $0x98] sm:$0xf] %v430
        %440 = vst [vmem:[#allocation2 + $0x9c] sm:$0xff] %v432
        %441 = vst [vmem:[#allocation2 + $0xa4] sm:$0xf] %v433
        %443 = vrot.lane.b32.xlu0 %v192, 88
        %v444 = vpop.permute.xlu0 %443
        %v445 = vsel %vm279, %v278, %v444
        %v448 = vpack.c.bf16 %v274, %v188
        %v449 = vpack.c.bf16 %v445, %v191
        %v452 = vunpack.c.l.b16 %v448
        %v453 = vunpack.c.l.b16 %v449
        %v454 = vunpack.c.h.b16 %v448
        %v455 = vunpack.c.h.b16 %v449
        %v456 = vpack.c.b16 %v296, %v452
        %v457 = vpack.c.b16 %v453, %v297
        %v458 = vpack.c.b16 %v300, %v454
        %v459 = vpack.c.b16 %v455, %v301
        %460 = vrot.lane.b32.xlu0 %v456, 24
        %v461 = vpop.permute.xlu0 %460
        %462 = vrot.lane.b32.xlu0 %v457, 24
        %v463 = vpop.permute.xlu0 %462
        %464 = vrot.lane.b32.xlu0 %v458, 24
        %v465 = vpop.permute.xlu0 %464
        %466 = vrot.lane.b32.xlu0 %v459, 24
        %v467 = vpop.permute.xlu0 %466
        %v468 = vrot.slane %v461, 4
        %v469 = vrot.slane %v463, 4
        %v470 = vrot.slane %v465, 4
        %v471 = vrot.slane %v467, 4
        %v472 = vsel %vm255, %v468, %v469
        %vm473 = vcmask 195584
        %v474 = vsel %vm473, %v461, %v472
        %v475 = vsel %vm473, %v463, %v469
        %v476 = vsel %vm255, %v470, %v471
        %v477 = vsel %vm473, %v465, %v476
        %v478 = vsel %vm473, %v467, %v471
        %483 = vst [vmem:[#allocation2 + $0xa8] sm:$0xff] %v474
        %484 = vst [vmem:[#allocation2 + $0xb0] sm:$0xf] %v475
        %485 = vst [vmem:[#allocation2 + $0xb4] sm:$0xff] %v477
        %486 = vst [vmem:[#allocation2 + $0xbc] sm:$0xf] %v478
        %487 = vrot.lane.b32.xlu0 %v192, 126
        %v488 = vpop.permute.xlu0 %487
        %v489 = vsel %vm205, %v204, %v488
        %v492 = vpack.c.bf16 %v489, %v191
        %v493 = vpack.c.bf16 %v488, %v192
        %v496 = vunpack.c.l.b16 %v492
        %v497 = vunpack.c.l.b16 %v493
        %v498 = vunpack.c.h.b16 %v492
        %v499 = vunpack.c.h.b16 %v493
        %v500 = vpack.c.b16 %v220, %v219
        %v501 = vpack.c.b16 %v497, %v496
        %v502 = vpack.c.b16 %v223, %v222
        %v503 = vpack.c.b16 %v499, %v498
        %504 = vrot.lane.b32.xlu0 %v500, 110
        %v505 = vpop.permute.xlu0 %504
        %506 = vrot.lane.b32.xlu0 %v501, 110
        %v507 = vpop.permute.xlu0 %506
        %508 = vrot.lane.b32.xlu0 %v502, 110
        %v509 = vpop.permute.xlu0 %508
        %510 = vrot.lane.b32.xlu0 %v503, 110
        %v511 = vpop.permute.xlu0 %510
        %v512 = vrot.slane %v505, 4
        %v513 = vrot.slane %v507, 4
        %v514 = vrot.slane %v509, 4
        %v515 = vrot.slane %v511, 4
        %v516 = vsel %vm255, %v512, %v513
        %vm517 = vcmask 900096
        %v518 = vsel %vm517, %v505, %v516
        %v519 = vsel %vm517, %v507, %v513
        %v520 = vsel %vm255, %v514, %v515
        %v521 = vsel %vm517, %v509, %v520
        %v522 = vsel %vm517, %v511, %v515
        %527 = vst [vmem:[#allocation2 + $0xc0] sm:$0xff] %v518
        %528 = vst [vmem:[#allocation2 + $0xc8] sm:$0xf] %v519
        %529 = vst [vmem:[#allocation2 + $0xcc] sm:$0xff] %v521
        %530 = vst [vmem:[#allocation2 + $0xd4] sm:$0xf] %v522
        %531 = vrot.lane.b32.xlu0 %v500, 106
        %v532 = vpop.permute.xlu0 %531
        %533 = vrot.lane.b32.xlu0 %v501, 106
        %v534 = vpop.permute.xlu0 %533
        %535 = vrot.lane.b32.xlu0 %v502, 106
        %v536 = vpop.permute.xlu0 %535
        %537 = vrot.lane.b32.xlu0 %v503, 106
        %v538 = vpop.permute.xlu0 %537
        %v539 = vrot.slane %v532, 4
        %v540 = vrot.slane %v534, 4
        %v541 = vrot.slane %v536, 4
        %v542 = vrot.slane %v538, 4
        %v543 = vsel %vm255, %v539, %v540
        %vm544 = vcmask 867328
        %v545 = vsel %vm544, %v532, %v543
        %v546 = vsel %vm544, %v534, %v540
        %v547 = vsel %vm255, %v541, %v542
        %v548 = vsel %vm544, %v536, %v547
        %v549 = vsel %vm544, %v538, %v542
        %554 = vst [vmem:[#allocation2 + $0xd8] sm:$0xff] %v545
        %555 = vst [vmem:[#allocation2 + $0xe0] sm:$0xf] %v546
        %556 = vst [vmem:[#allocation2 + $0xe4] sm:$0xff] %v548
        %557 = vst [vmem:[#allocation2 + $0xec] sm:$0xf] %v549
        %558 = vrot.lane.b32.xlu0 %v500, 64
        %v559 = vpop.permute.xlu0 %558
        %560 = vrot.lane.b32.xlu0 %v501, 64
        %v561 = vpop.permute.xlu0 %560
        %562 = vrot.lane.b32.xlu0 %v502, 64
        %v563 = vpop.permute.xlu0 %562
        %564 = vrot.lane.b32.xlu0 %v503, 64
        %v565 = vpop.permute.xlu0 %564
        %v566 = vrot.slane %v559, 4
        %v567 = vrot.slane %v561, 4
        %v568 = vrot.slane %v563, 4
        %v569 = vrot.slane %v565, 4
        %v570 = vsel %vm255, %v566, %v567
        %vm571 = vcmask 523264
        %v572 = vsel %vm571, %v559, %v570
        %v573 = vsel %vm571, %v561, %v567
        %v574 = vsel %vm255, %v568, %v569
        %v575 = vsel %vm571, %v563, %v574
        %v576 = vsel %vm571, %v565, %v569
        %581 = vst [vmem:[#allocation2 + $0xf0] sm:$0xff] %v572
        %582 = vst [vmem:[#allocation2 + $0xf8] sm:$0xf] %v573
        %583 = vst [vmem:[#allocation2 + $0xfc] sm:$0xff] %v575
        %584 = vst [vmem:[#allocation2 + $0x104] sm:$0xf] %v576
        %585 = vrot.lane.b32.xlu0 %v500, 60
        %v586 = vpop.permute.xlu0 %585
        %587 = vrot.lane.b32.xlu0 %v501, 60
        %v588 = vpop.permute.xlu0 %587
        %589 = vrot.lane.b32.xlu0 %v502, 60
        %v590 = vpop.permute.xlu0 %589
        %591 = vrot.lane.b32.xlu0 %v503, 60
        %v592 = vpop.permute.xlu0 %591
        %v593 = vrot.slane %v586, 4
        %v594 = vrot.slane %v588, 4
        %v595 = vrot.slane %v590, 4
        %v596 = vrot.slane %v592, 4
        %v597 = vsel %vm255, %v593, %v594
        %vm598 = vcmask 490496
        %v599 = vsel %vm598, %v586, %v597
        %v600 = vsel %vm598, %v588, %v594
        %v601 = vsel %vm255, %v595, %v596
        %v602 = vsel %vm598, %v590, %v601
        %v603 = vsel %vm598, %v592, %v596
        %608 = vst [vmem:[#allocation2 + $0x108] sm:$0xff] %v599
        %609 = vst [vmem:[#allocation2 + $0x110] sm:$0xf] %v600
        %610 = vst [vmem:[#allocation2 + $0x114] sm:$0xff] %v602
        %611 = vst [vmem:[#allocation2 + $0x11c] sm:$0xf] %v603
        %v612 = vpack.c.bf16 0.0, %v189
        %v613 = vpack.c.bf16 0.0, %v190
        %v614 = vpack.c.bf16 0.0, %v191
        %v615 = vpack.c.bf16 0.0, %v192
        %v620 = vunpack.c.l.b16 %v612
        %v621 = vunpack.c.l.b16 %v613
        %v622 = vunpack.c.l.b16 %v614
        %v623 = vunpack.c.l.b16 %v615
        %v624 = vunpack.c.h.b16 %v612
        %v625 = vunpack.c.h.b16 %v613
        %v626 = vunpack.c.h.b16 %v614
        %v627 = vunpack.c.h.b16 %v615
        %v628 = vpack.c.b16 %v621, %v620
        %v629 = vpack.c.b16 %v623, %v622
        %v630 = vpack.c.b16 %v625, %v624
        %v631 = vpack.c.b16 %v627, %v626
        %632 = vrot.lane.b32.xlu0 %v628, 56
        %v633 = vpop.permute.xlu0 %632
        %634 = vrot.lane.b32.xlu0 %v629, 56
        %v635 = vpop.permute.xlu0 %634
        %636 = vrot.lane.b32.xlu0 %v630, 56
        %v637 = vpop.permute.xlu0 %636
        %638 = vrot.lane.b32.xlu0 %v631, 56
        %v639 = vpop.permute.xlu0 %638
        %v640 = vrot.slane %v633, 4
        %v641 = vrot.slane %v635, 4
        %v642 = vrot.slane %v637, 4
        %v643 = vrot.slane %v639, 4
        %v644 = vsel %vm255, %v640, %v641
        %vm645 = vcmask 457728
        %v646 = vsel %vm645, %v633, %v644
        %v647 = vsel %vm645, %v635, %v641
        %v648 = vsel %vm255, %v642, %v643
        %v649 = vsel %vm645, %v637, %v648
        %v650 = vsel %vm645, %v639, %v643
        %655 = vst [vmem:[#allocation2 + $0x120] sm:$0xff] %v646
        %656 = vst [vmem:[#allocation2 + $0x128] sm:$0xf] %v647
        %657 = vst [vmem:[#allocation2 + $0x12c] sm:$0xff] %v649
        %658 = vst [vmem:[#allocation2 + $0x134] sm:$0xf] %v650
        %v659 = vld [vmem:[%s1] sm:$0xff]
        %v660 = vld [vmem:[#allocation2] sm:$0xff]
        %v661 = vld [vmem:[#allocation2 + $0x8] sm:$0xf]
        %v662 = vld [vmem:[#allocation2 + $0xc] sm:$0xff]
        %v663 = vld [vmem:[#allocation2 + $0x14] sm:$0xf]
        %v664 = vld [vmem:[#allocation2 + $0x18] sm:$0xff]
        %v665 = vld [vmem:[#allocation2 + $0x20] sm:$0xf]
        %v666 = vld [vmem:[#allocation2 + $0x24] sm:$0xff]
        %v667 = vld [vmem:[#allocation2 + $0x2c] sm:$0xf]
        %v668 = vld [vmem:[#allocation2 + $0x30] sm:$0xff]
        %v669 = vld [vmem:[#allocation2 + $0x38] sm:$0xf]
        %v670 = vld [vmem:[#allocation2 + $0x3c] sm:$0xff]
        %v671 = vld [vmem:[#allocation2 + $0x44] sm:$0xf]
        %v672 = vld [vmem:[#allocation2 + $0x48] sm:$0xff]
        %v673 = vld [vmem:[#allocation2 + $0x50] sm:$0xf]
        %v674 = vld [vmem:[#allocation2 + $0x54] sm:$0xff]
        %v675 = vld [vmem:[#allocation2 + $0x5c] sm:$0xf]
        %v676 = vld [vmem:[#allocation2 + $0x60] sm:$0xff]
        %v677 = vld [vmem:[#allocation2 + $0x68] sm:$0xf]
        %v678 = vld [vmem:[#allocation2 + $0x6c] sm:$0xff]
        %v679 = vld [vmem:[#allocation2 + $0x74] sm:$0xf]
        %v680 = vld [vmem:[#allocation2 + $0x78] sm:$0xff]
        %v681 = vld [vmem:[#allocation2 + $0x80] sm:$0xf]
        %v682 = vld [vmem:[#allocation2 + $0x84] sm:$0xff]
        %v683 = vld [vmem:[#allocation2 + $0x8c] sm:$0xf]
        %v684 = vld [vmem:[#allocation2 + $0x90] sm:$0xff]
        %v685 = vld [vmem:[#allocation2 + $0x98] sm:$0xf]
        %v686 = vld [vmem:[#allocation2 + $0x9c] sm:$0xff]
        %v687 = vld [vmem:[#allocation2 + $0xa4] sm:$0xf]
        %v688 = vld [vmem:[#allocation2 + $0xa8] sm:$0xff]
        %v689 = vld [vmem:[#allocation2 + $0xb0] sm:$0xf]
        %v690 = vld [vmem:[#allocation2 + $0xb4] sm:$0xff]
        %v691 = vld [vmem:[#allocation2 + $0xbc] sm:$0xf]
        %v692 = vld [vmem:[#allocation2 + $0xc0] sm:$0xff]
        %v693 = vld [vmem:[#allocation2 + $0xc8] sm:$0xf]
        %v694 = vld [vmem:[#allocation2 + $0xcc] sm:$0xff]
        %v695 = vld [vmem:[#allocation2 + $0xd4] sm:$0xf]
        %v696 = vld [vmem:[#allocation2 + $0xd8] sm:$0xff]
        %v697 = vld [vmem:[#allocation2 + $0xe0] sm:$0xf]
        %v698 = vld [vmem:[#allocation2 + $0xe4] sm:$0xff]
        %v699 = vld [vmem:[#allocation2 + $0xec] sm:$0xf]
        %v700 = vld [vmem:[#allocation2 + $0xf0] sm:$0xff]
        %v701 = vld [vmem:[#allocation2 + $0xf8] sm:$0xf]
        %v702 = vld [vmem:[#allocation2 + $0xfc] sm:$0xff]
        %v703 = vld [vmem:[#allocation2 + $0x104] sm:$0xf]
        %v704 = vld [vmem:[#allocation2 + $0x108] sm:$0xff]
        %v705 = vld [vmem:[#allocation2 + $0x110] sm:$0xf]
        %v706 = vld [vmem:[#allocation2 + $0x114] sm:$0xff]
        %v707 = vld [vmem:[#allocation2 + $0x11c] sm:$0xf]
        %v708 = vld [vmem:[#allocation2 + $0x120] sm:$0xff]
        %v709 = vld [vmem:[#allocation2 + $0x128] sm:$0xf]
        %v710 = vld [vmem:[#allocation2 + $0x12c] sm:$0xff]
        %v711 = vld [vmem:[#allocation2 + $0x134] sm:$0xf]
        %v712 = vld [vmem:[%s2] sm:$0xff]
        %714 = vset.pattern.permute.xlu0 0
        %715 = vperm.xlu0 %714, %v712
        %v716 = vpop.permute.xlu0 %715
        %v719 = vunpack.c.l.b16 %v659
        %v720 = vunpack.c.h.b16 %v659
        %v721 = vpack.c.b16 %v719, %v719
        %v722 = vpack.c.b16 %v720, %v720
        %v776 = vunpack.c.l.b16 %v660
        %v777 = vunpack.c.h.b16 %v660
        %v778 = vunpack.c.l.b16 %v661
        %v779 = vunpack.c.l.b16 %v662
        %v780 = vunpack.c.h.b16 %v662
        %v781 = vunpack.c.l.b16 %v663
        %v782 = vunpack.c.l.b16 %v664
        %v783 = vunpack.c.h.b16 %v664
        %v784 = vunpack.c.l.b16 %v665
        %v785 = vunpack.c.l.b16 %v666
        %v786 = vunpack.c.h.b16 %v666
        %v787 = vunpack.c.l.b16 %v667
        %v788 = vunpack.c.l.b16 %v668
        %v789 = vunpack.c.h.b16 %v668
        %v790 = vunpack.c.l.b16 %v669
        %v791 = vunpack.c.l.b16 %v670
        %v792 = vunpack.c.h.b16 %v670
        %v793 = vunpack.c.l.b16 %v671
        %v794 = vunpack.c.l.b16 %v672
        %v795 = vunpack.c.h.b16 %v672
        %v796 = vunpack.c.l.b16 %v673
        %v797 = vunpack.c.l.b16 %v674
        %v798 = vunpack.c.h.b16 %v674
        %v799 = vunpack.c.l.b16 %v675
        %v800 = vunpack.c.l.b16 %v676
        %v801 = vunpack.c.h.b16 %v676
        %v802 = vunpack.c.l.b16 %v677
        %v803 = vunpack.c.l.b16 %v678
        %v804 = vunpack.c.h.b16 %v678
        %v805 = vunpack.c.l.b16 %v679
        %v806 = vunpack.c.l.b16 %v680
        %v807 = vunpack.c.h.b16 %v680
        %v808 = vunpack.c.l.b16 %v681
        %v809 = vunpack.c.l.b16 %v682
        %v810 = vunpack.c.h.b16 %v682
        %v811 = vunpack.c.l.b16 %v683
        %v812 = vunpack.c.l.b16 %v684
        %v813 = vunpack.c.h.b16 %v684
        %v814 = vunpack.c.l.b16 %v685
        %v815 = vunpack.c.l.b16 %v686
        %v816 = vunpack.c.h.b16 %v686
        %v817 = vunpack.c.l.b16 %v687
        %v818 = vunpack.c.l.b16 %v688
        %v819 = vunpack.c.h.b16 %v688
        %v820 = vunpack.c.l.b16 %v689
        %v821 = vunpack.c.l.b16 %v690
        %v822 = vunpack.c.h.b16 %v690
        %v823 = vunpack.c.l.b16 %v691
        %v824 = vunpack.c.l.b16 %v692
        %v825 = vunpack.c.h.b16 %v692
        %v826 = vunpack.c.l.b16 %v693
        %v827 = vunpack.c.l.b16 %v694
        %v828 = vunpack.c.h.b16 %v694
        %v829 = vunpack.c.l.b16 %v695
        %v830 = vunpack.c.l.b16 %v696
        %v831 = vunpack.c.h.b16 %v696
        %v832 = vunpack.c.l.b16 %v697
        %v833 = vunpack.c.l.b16 %v698
        %v834 = vunpack.c.h.b16 %v698
        %v835 = vunpack.c.l.b16 %v699
        %v836 = vunpack.c.l.b16 %v700
        %v837 = vunpack.c.h.b16 %v700
        %v838 = vunpack.c.l.b16 %v701
        %v839 = vunpack.c.l.b16 %v702
        %v840 = vunpack.c.h.b16 %v702
        %v841 = vunpack.c.l.b16 %v703
        %v842 = vunpack.c.l.b16 %v704
        %v843 = vunpack.c.h.b16 %v704
        %v844 = vunpack.c.l.b16 %v705
        %v845 = vunpack.c.l.b16 %v706
        %v846 = vunpack.c.h.b16 %v706
        %v847 = vunpack.c.l.b16 %v707
        %v848 = vunpack.c.l.b16 %v708
        %v849 = vunpack.c.h.b16 %v708
        %v850 = vunpack.c.l.b16 %v709
        %v851 = vunpack.c.l.b16 %v710
        %v852 = vunpack.c.h.b16 %v710
        %v853 = vunpack.c.l.b16 %v711
        %v854 = vpack.c.b16 %v779, %v776
        %v855 = vpack.c.b16 %v780, %v777
        %v856 = vpack.c.b16 %v781, %v778
        %v857 = vpack.c.b16 %v785, %v782
        %v858 = vpack.c.b16 %v786, %v783
        %v859 = vpack.c.b16 %v787, %v784
        %v860 = vpack.c.b16 %v791, %v788
        %v861 = vpack.c.b16 %v792, %v789
        %v862 = vpack.c.b16 %v793, %v790
        %v863 = vpack.c.b16 %v797, %v794
        %v864 = vpack.c.b16 %v798, %v795
        %v865 = vpack.c.b16 %v799, %v796
        %v866 = vpack.c.b16 %v803, %v800
        %v867 = vpack.c.b16 %v804, %v801
        %v868 = vpack.c.b16 %v805, %v802
        %v869 = vpack.c.b16 %v809, %v806
        %v870 = vpack.c.b16 %v810, %v807
        %v871 = vpack.c.b16 %v811, %v808
        %v872 = vpack.c.b16 %v815, %v812
        %v873 = vpack.c.b16 %v816, %v813
        %v874 = vpack.c.b16 %v817, %v814
        %v875 = vpack.c.b16 %v821, %v818
        %v876 = vpack.c.b16 %v822, %v819
        %v877 = vpack.c.b16 %v823, %v820
        %v878 = vpack.c.b16 %v827, %v824
        %v879 = vpack.c.b16 %v828, %v825
        %v880 = vpack.c.b16 %v829, %v826
        %v881 = vpack.c.b16 %v833, %v830
        %v882 = vpack.c.b16 %v834, %v831
        %v883 = vpack.c.b16 %v835, %v832
        %v884 = vpack.c.b16 %v839, %v836
        %v885 = vpack.c.b16 %v840, %v837
        %v886 = vpack.c.b16 %v841, %v838
        %v887 = vpack.c.b16 %v845, %v842
        %v888 = vpack.c.b16 %v846, %v843
        %v889 = vpack.c.b16 %v847, %v844
        %v890 = vpack.c.b16 %v851, %v848
        %v891 = vpack.c.b16 %v852, %v849
        %v892 = vpack.c.b16 %v853, %v850
        %vm932 = vcmask 654336
        %v934 = vsel %vm932, %v722, 0
        %936 = vmatprep.subr.bf16.mxu0 %v876
        %937 = vmatpush1.bf16.msra.mxu0 %v875
        %938 = vmatprep.subr.bf16.mxu0 %v873
        %939 = vmatpush1.bf16.msra.mxu0 %v872
        %940 = vmatprep.subr.bf16.mxu0 %v870
        %941 = vmatpush1.bf16.msra.mxu0 %v869
        %942 = vmatprep.subr.bf16.mxu0 %v867
        %943 = vmatpush1.bf16.msra.mxu0 %v866
        %944 = vmatprep.subr.bf16.mxu0 %v864
        %945 = vmatpush1.bf16.msra.mxu0 %v863
        %946 = vmatprep.subr.bf16.mxu0 %v861
        %947 = vmatpush1.bf16.msra.mxu0 %v860
        %948 = vmatprep.subr.bf16.mxu0 %v858
        %949 = vmatpush1.bf16.msra.mxu0 %v857
        %950 = vmatprep.subr.bf16.mxu0 %v855
        %951 = vmatpush1.bf16.msra.mxu0 %v854
        %952 = vmatprep.subr.bf16.mxu0 0
        %953 = vmatpush2.bf16.msra.mxu0 0
        %954 = vmatprep.subr.bf16.mxu0 0
        %955 = vmatpush2.bf16.msra.mxu0 0
        %956 = vmatprep.subr.bf16.mxu0 0
        %957 = vmatpush2.bf16.msra.mxu0 0
        %958 = vmatprep.subr.bf16.mxu0 %v891
        %959 = vmatpush2.bf16.msra.mxu0 %v890
        %960 = vmatprep.subr.bf16.mxu0 %v888
        %961 = vmatpush2.bf16.msra.mxu0 %v887
        %962 = vmatprep.subr.bf16.mxu0 %v885
        %963 = vmatpush2.bf16.msra.mxu0 %v884
        %964 = vmatprep.subr.bf16.mxu0 %v882
        %965 = vmatpush2.bf16.msra.mxu0 %v881
        %966 = vmatprep.subr.bf16.mxu0 %v879
        %967 = vmatpush2.bf16.msra.mxu0 %v878
        %968 = vmatprep.mubr.bf16.mxu0 %v934
        %969 = vmatmul.mubr.bf16.gmra.mxu0 %v721
        %v970 = vpop.f32.mrf.mxu0
        %v971 = vadd.f32 %v716, %v970
        %v972 = vpop.f32.mrf.mxu0
        %v973 = vadd.f32 %v716, %v972
        %v974 = vpop.f32.mrf.mxu0
        %v975 = vpop.f32.mrf.mxu0
        %976 = vdwg.mxu0
        %977 = vmatprep.subr.bf16.mxu0 0
        %978 = vmatpush1.bf16.msra.mxu0 %v877
        %979 = vmatprep.subr.bf16.mxu0 0
        %980 = vmatpush1.bf16.msra.mxu0 %v874
        %981 = vmatprep.subr.bf16.mxu0 0
        %982 = vmatpush1.bf16.msra.mxu0 %v871
        %983 = vmatprep.subr.bf16.mxu0 0
        %984 = vmatpush1.bf16.msra.mxu0 %v868
        %985 = vmatprep.subr.bf16.mxu0 0
        %986 = vmatpush1.bf16.msra.mxu0 %v865
        %987 = vmatprep.subr.bf16.mxu0 0
        %988 = vmatpush1.bf16.msra.mxu0 %v862
        %989 = vmatprep.subr.bf16.mxu0 0
        %990 = vmatpush1.bf16.msra.mxu0 %v859
        %991 = vmatprep.subr.bf16.mxu0 0
        %992 = vmatpush1.bf16.msra.mxu0 %v856
        %993 = vmatprep.subr.bf16.mxu0 0
        %994 = vmatpush2.bf16.msra.mxu0 0
        %995 = vmatprep.subr.bf16.mxu0 0
        %996 = vmatpush2.bf16.msra.mxu0 0
        %997 = vmatprep.subr.bf16.mxu0 0
        %998 = vmatpush2.bf16.msra.mxu0 0
        %999 = vmatprep.subr.bf16.mxu0 0
        %1000 = vmatpush2.bf16.msra.mxu0 %v892
        %1001 = vmatprep.subr.bf16.mxu0 0
        %1002 = vmatpush2.bf16.msra.mxu0 %v889
        %1003 = vmatprep.subr.bf16.mxu0 0
        %1004 = vmatpush2.bf16.msra.mxu0 %v886
        %1005 = vmatprep.subr.bf16.mxu0 0
        %1006 = vmatpush2.bf16.msra.mxu0 %v883
        %1007 = vmatprep.subr.bf16.mxu0 0
        %1008 = vmatpush2.bf16.msra.mxu0 %v880
        %1009 = vmatprep.mubr.bf16.mxu0 %v934
        %1010 = vmatmul.mubr.bf16.gmra.mxu0 %v721
        %v1011 = vpop.f32.mrf.mxu0
        %v1012 = vadd.f32 %v716, %v1011
        %v1013 = vpop.f32.mrf.mxu0
        %v1014 = vpop.f32.mrf.mxu0
        %v1015 = vpop.f32.mrf.mxu0
        %1016 = vdwg.mxu0
        %v1017 = vmax.f32 %v971, 0.0
        %v1018 = vmax.f32 %v973, 0.0
        %v1019 = vmax.f32 %v1012, 0.0
        %1020 = vst [vmem:[%s186] sm:$0xff] %v1017
        %1021 = vst [vmem:[%s186 + $0x8] sm:$0xff] %v1018
        %1022 = vst [vmem:[%s186 + $0x10] sm:$0xff] %v1019
        %s1023 = sand.u32 %s96, 1
        %s1024 = scalar_lea.sflag [#allocation5], %s1023
        %s1025 = sand.u32 %s96, 1
        %s1026 = smul.addr %s1025, 24
        %s1027 = scalar_lea.vmem [#allocation6], %s1026
        // Predicated region
        $region37: #{tpu_custom_call.1} parent=31 // pred_check
          %p1028 = pneg %p106
        $region38: #{tpu_custom_call.1} parent=31 // pred_check_branch
          %1030 = sbr.rel (%p1028) target = $region40
        $region39: #{tpu_custom_call.1} parent=31 // pred_region
          %s1032 = ssub.s32 384, 384
          %1033 = vsyncadd %s1024, %s1032
          %s1034 = smul.addr %s20, 3
          %s1035 = smul.addr %s1034, 128
          %s1036 = scalar_lea.hbm %s3, %s1035
          %s1038 = sshll.u32 %s1027, 4
          %s1039 = int_to_ptr.vmem [resolvable:$true] %s1038
          %1041 = dma.vmem_to_hbm [thread:$0]  %s1039, 384, %s1036, %s1024
        $region40: #{tpu_custom_call.1} parent=31 // pred_fallthru
          _
      $region32: #{tpu_custom_call.1} parent=5 // pred_fallthru
        _
      %p1042 = scmp.le.s32.totalorder 2, %s15
      // Predicated region
      $region41: #{tpu_custom_call.1} parent=5 // pred_check
        %p1043 = pneg %p1042
      $region42: #{tpu_custom_call.1} parent=5 // pred_check_branch
        %1045 = sbr.rel (%p1043) target = $region44
      $region43: #{tpu_custom_call.1} parent=5 // pred_region
        %s1046 = ssub.s32 %s15, 2
        // Predicated region
        $region45: #{tpu_custom_call.1} parent=43 // pred_check
          %p1047 = pneg %p112
        $region46: #{tpu_custom_call.1} parent=43 // pred_check_branch
          %1049 = sbr.rel (%p1047) target = $region48
        $region47: #{tpu_custom_call.1} parent=43 // pred_region
          %s1050 = sand.u32 %s97, 1
          %s1051 = scalar_lea.sflag [#allocation5], %s1050
          %s1052 = sand.u32 %s97, 1
          %s1053 = smul.addr %s1052, 24
          %s1054 = scalar_lea.vmem [#allocation6], %s1053
          %1055 = dma.done %s1051, 384
        $region48: #{tpu_custom_call.1} parent=43 // pred_fallthru
          _
      $region44: #{tpu_custom_call.1} parent=5 // pred_fallthru
        _
    $region6: #{tpu_custom_call.1} parent=1 // loop_footer
      %s19 = sadd.s32 1, %s15
    $region7: #{tpu_custom_call.1} parent=1 // loop_footer_branch
      %14 = sbr.rel target = $region3
    $region8: #{tpu_custom_call.1} parent=1 // loop_exit
      _
    %1056 = vsyncpa [#allocation4], 1
    %s1057 = scalar_lea.sflag [#allocation4], 1
    %1058 = vsyncpa %s1057, 1
    %1059 = vsyncpa [#allocation5], 1
    %s1060 = scalar_lea.sflag [#allocation5], 1
    %1061 = vsyncpa %s1060, 1

</llo_original>
